<compile_context>
chip_gen: v5e
topology: v5e:2x2
jax: 0.10.0
libtpu: 0.0.40
codegen_flags: <defaults>
</compile_context>

<pallas_src>
import functools

import jax
import jax.numpy as jnp
from jax import lax
from jax.experimental import pallas as pl
from jax.experimental.pallas import tpu as pltpu


def _attention_kernel(x_ref, ctx_ref, mask_bias_ref,
                      wq_ref, wk_ref, wv_ref, wo_ref, bias_ref,
                      o_ref,
                      k_scr, v_scr, acc_scr,
                      *, heads, dim_head):
    """One grid step = one (batch, query-tile) pair.

    Shapes seen by the kernel:
      x_ref:         (1, Nt, D)    bf16
      ctx_ref:       (1, M,  D)    bf16
      mask_bias_ref: (1, 1,  M)    f32   (0 kept, -1e30 masked)
      wq_ref:        (D, inner)    bf16  (pre-scaled by dim_head ** -0.5)
      wk_ref:        (D, inner)    bf16
      wv_ref:        (D, inner)    bf16
      wo_ref:        (inner, D)    bf16
      bias_ref:      (1, D)        f32
      o_ref:         (1, Nt, D)    output dtype
      k_scr, v_scr:  (M, inner)    bf16  VMEM scratch (per-batch K/V)
      acc_scr:       (Nt, inner)   bf16  VMEM scratch (head-concat accumulator)
    """
    # --- K/V projection: only once per batch (first query tile). -------------
    @pl.when(pl.program_id(1) == 0)
    def _():
        c = ctx_ref[0]                                                 # (M, D)
        k_scr[...] = jnp.dot(c, wk_ref[...],
                             preferred_element_type=jnp.float32
                             ).astype(jnp.bfloat16)                   # (M, inner)
        v_scr[...] = jnp.dot(c, wv_ref[...],
                             preferred_element_type=jnp.float32
                             ).astype(jnp.bfloat16)                   # (M, inner)

    # --- Q projection for this query tile (scale already folded into Wq). ----
    x = x_ref[0]                                                       # (Nt, D)
    q = jnp.dot(x, wq_ref[...],
                preferred_element_type=jnp.float32).astype(jnp.bfloat16)  # (Nt, inner)

    k_all = k_scr[...]                                                 # (M, inner) bf16
    v_all = v_scr[...]                                                 # (M, inner) bf16
    mask_bias = mask_bias_ref[0]                                       # (1, M) f32

    # --- Per-head attention (static head loop, static lane slices). ----------
    for h in range(heads):
        lo = h * dim_head
        qh = q[:, lo:lo + dim_head]                                    # (Nt, Dh) bf16
        kh = k_all[:, lo:lo + dim_head]                                # (M,  Dh) bf16
        vh = v_all[:, lo:lo + dim_head]                                # (M,  Dh) bf16

        # Contract last dims directly (QK^T in "NT" form; no explicit kh.T).
        dots = lax.dot_general(qh, kh, (((1,), (1,)), ((), ())),
                               preferred_element_type=jnp.float32)     # (Nt, M)
        dots = dots + mask_bias

        m = jnp.max(dots, axis=-1, keepdims=True)
        p = jnp.exp(dots - m)                                          # f32 (v5e-safe)
        l = jnp.sum(p, axis=-1, keepdims=True)                         # f32 row sums

        # Unnormalized PV matmul; normalize AFTER (Nt*Dh vmuls, not Nt*M).
        pv = jnp.dot(p.astype(jnp.bfloat16), vh,
                     preferred_element_type=jnp.float32)               # (Nt, Dh)
        pv = pv * pl.reciprocal(l, approx=True)
        acc_scr[:, lo:lo + dim_head] = pv.astype(jnp.bfloat16)

    # --- Single output projection over the full inner dim, plus bias. --------
    o = jnp.dot(acc_scr[...], wo_ref[...],
                preferred_element_type=jnp.float32) + bias_ref[...]    # (Nt, D)
    o_ref[0] = o.astype(o_ref.dtype)


def _pick_query_tile(n_padded, cap=256):
    """Largest divisor of n_padded that is a multiple of 8 and <= cap."""
    if n_padded <= cap:
        return n_padded
    for t in range(cap, 0, -8):
        if n_padded % t == 0:
            return t
    return 8  # unreachable: n_padded is a multiple of 8


def attention_forward(x, context, mask, wq, wkv, wo, bo, *, heads, dim_head):
    """Pallas wrapper reproducing Attention.forward.

    x:       (B, N, dim) f32
    context: (B, M, dim) f32
    mask:    (B, M) bool or None
    wq:      (inner, dim)      -- nn.Linear(dim, inner, bias=False).weight
    wkv:     (2*inner, dim)    -- nn.Linear(dim, 2*inner, bias=False).weight
    wo:      (dim, inner)      -- nn.Linear(inner, dim).weight
    bo:      (dim,)            -- nn.Linear(inner, dim).bias
    """
    B, N, D = x.shape
    M = context.shape[1]
    H, Dh = heads, dim_head
    inner = H * Dh
    scale = float(Dh) ** -0.5

    if mask is None:
        mask = jnp.ones((B, M), dtype=bool)
    # Additive mask bias: 0 where kept, -1e30 where masked.
    mask_bias = jnp.where(mask, 0.0, -1e30).astype(jnp.float32).reshape(B, 1, M)

    compute_dtype = jnp.bfloat16
    x_c = x.astype(compute_dtype)
    ctx_c = context.astype(compute_dtype)

    # Pad the query axis to a multiple of 8 (padded rows are discarded after).
    n_pad = (-N) % 8
    if n_pad:
        x_c = jnp.pad(x_c, ((0, 0), (0, n_pad), (0, 0)))
    Np = N + n_pad
    n_t = _pick_query_tile(Np)
    n_tiles = Np // n_t

    # Head-fused, lane-dense weight layouts (one-time wrapper transforms).
    wq_t = (wq.T * scale).astype(compute_dtype)        # (D, inner), scale folded in
    wk_t = wkv[:inner].T.astype(compute_dtype)         # (D, inner)
    wv_t = wkv[inner:].T.astype(compute_dtype)         # (D, inner)
    wo_t = wo.T.astype(compute_dtype)                  # (inner, D)
    bias = bo.reshape(1, D).astype(jnp.float32)

    kernel = functools.partial(_attention_kernel, heads=H, dim_head=Dh)

    # Advisory cost estimate for the surrounding XLA schedule.
    flops = 2 * B * (Np * D * inner            # Q projection
                     + 2 * M * D * inner       # K/V projections (once per batch)
                     + 2 * H * Np * M * Dh     # QK^T + PV
                     + Np * inner * D)         # output projection
    transcendentals = B * H * Np * M
    bytes_accessed = (B * Np * D * 2 + B * M * D * 2 + B * M * 4
                      + 2 * (3 * D * inner + inner * D) + D * 4
                      + B * Np * D * x.dtype.itemsize)

    out = pl.pallas_call(
        kernel,
        out_shape=jax.ShapeDtypeStruct((B, Np, D), x.dtype),
        grid_spec=pltpu.PrefetchScalarGridSpec(
            num_scalar_prefetch=0,
            grid=(B, n_tiles),
            in_specs=[
                pl.BlockSpec((1, n_t, D), lambda b, i: (b, i, 0)),     # x tile
                pl.BlockSpec((1, M, D), lambda b, i: (b, 0, 0)),       # context
                pl.BlockSpec((1, 1, M), lambda b, i: (b, 0, 0)),       # mask bias
                pl.BlockSpec((D, inner), lambda b, i: (0, 0)),         # Wq (resident)
                pl.BlockSpec((D, inner), lambda b, i: (0, 0)),         # Wk (resident)
                pl.BlockSpec((D, inner), lambda b, i: (0, 0)),         # Wv (resident)
                pl.BlockSpec((inner, D), lambda b, i: (0, 0)),         # Wo (resident)
                pl.BlockSpec((1, D), lambda b, i: (0, 0)),             # bias
            ],
            out_specs=pl.BlockSpec((1, n_t, D), lambda b, i: (b, i, 0)),
            scratch_shapes=[
                pltpu.VMEM((M, inner), jnp.bfloat16),   # K (per-batch, reused)
                pltpu.VMEM((M, inner), jnp.bfloat16),   # V (per-batch, reused)
                pltpu.VMEM((n_t, inner), jnp.bfloat16), # head-concat accumulator
            ],
        ),
        compiler_params=pltpu.CompilerParams(
            # Query-tile axis must be "arbitrary": K/V scratch computed at
            # tile 0 is reused by the later tiles of the same batch.
            dimension_semantics=("parallel", "arbitrary"),
            vmem_limit_bytes=64 * 1024 * 1024,
        ),
        cost_estimate=pl.CostEstimate(flops=flops,
                                      transcendentals=transcendentals,
                                      bytes_accessed=bytes_accessed),
    )(x_c, ctx_c, mask_bias, wq_t, wk_t, wv_t, wo_t, bias)

    if n_pad:
        out = out[:, :N, :]
    return out


def attention_reference(x, context, mask, wq, wkv, wo, bo, *, heads, dim_head):
    """Pure-JAX reference mirroring the PyTorch forward exactly."""
    B, N, D = x.shape
    H, Dh = heads, dim_head
    inner = H * Dh
    scale = float(Dh) ** -0.5

    q = x @ wq.T                                   # (B, N, inner)
    kv = context @ wkv.T                           # (B, M, 2*inner)
    k, v = kv[..., :inner], kv[..., inner:]

    def split_heads(t):
        b, n, _ = t.shape
        return t.reshape(b, n, H, Dh).transpose(0, 2, 1, 3)   # (B, H, n, Dh)

    q, k, v = map(split_heads, (q, k, v))
    dots = jnp.einsum('bhid,bhjd->bhij', q, k) * scale
    if mask is not None:
        mask_value = -jnp.finfo(dots.dtype).max
        dots = jnp.where(mask[:, None, None, :], dots, mask_value)
    attn = jax.nn.softmax(dots, axis=-1)
    out = jnp.einsum('bhij,bhjd->bhid', attn, v)
    out = out.transpose(0, 2, 1, 3).reshape(B, N, inner)
    return out @ wo.T + bo


if __name__ == "__main__":
    # Small shapes consistent with the module.
    B, N, M = 2, 8, 8
    dim, heads, dim_head = 32, 4, 16
    inner = heads * dim_head

    key = jax.random.PRNGKey(0)
    kx, kc, kq, kkv, kwo, kbo, km = jax.random.split(key, 7)

    x = jax.random.normal(kx, (B, N, dim), dtype=jnp.float32)
    context = jax.random.normal(kc, (B, M, dim), dtype=jnp.float32)
    # Mask: keep most context tokens, drop the last one of each batch.
    mask = jnp.ones((B, M), dtype=bool).at[:, -1].set(False)

    # Deterministic parameter init (nn.Linear-style uniform bounds).
    def uinit(k, shape, fan_in):
        bound = 1.0 / (fan_in ** 0.5)
        return jax.random.uniform(k, shape, jnp.float32, -bound, bound)

    wq = uinit(kq, (inner, dim), dim)            # to_q.weight
    wkv = uinit(kkv, (2 * inner, dim), dim)      # to_kv.weight
    wo = uinit(kwo, (dim, inner), inner)         # to_out.weight
    bo = uinit(kbo, (dim,), inner)               # to_out.bias

    out = attention_forward(x, context, mask, wq, wkv, wo, bo,
                            heads=heads, dim_head=dim_head)
    out = jax.block_until_ready(out)

    ref = attention_reference(x, context, mask, wq, wkv, wo, bo,
                              heads=heads, dim_head=dim_head)
    assert out.shape == (B, N, dim)
    # bf16 MXU operands + approx reciprocal -> loosened tolerance.
    assert jnp.allclose(out, ref, rtol=2e-2, atol=2e-2), (
        float(jnp.max(jnp.abs(out - ref))))

    print("KERNEL_OK")
</pallas_src>

<mosaic_0001>
module attributes {stable_mosaic.version = 11 : i64} {
  func.func @_attention_kernel(%arg0: i32, %arg1: i32, %arg2: memref<1x8x32xbf16, #tpu.memory_space<vmem>>, %arg3: memref<1x8x32xbf16, #tpu.memory_space<vmem>>, %arg4: memref<1x1x8xf32, #tpu.memory_space<vmem>>, %arg5: memref<32x64xbf16, #tpu.memory_space<vmem>>, %arg6: memref<32x64xbf16, #tpu.memory_space<vmem>>, %arg7: memref<32x64xbf16, #tpu.memory_space<vmem>>, %arg8: memref<64x32xbf16, #tpu.memory_space<vmem>>, %arg9: memref<1x32xf32, #tpu.memory_space<vmem>>, %arg10: memref<1x8x32xf32, #tpu.memory_space<vmem>>, %arg11: memref<8x64xbf16, #tpu.memory_space<vmem>>, %arg12: memref<8x64xbf16, #tpu.memory_space<vmem>>, %arg13: memref<8x64xbf16, #tpu.memory_space<vmem>>) attributes {dimension_semantics = [#tpu.dimension_semantics<parallel>, #tpu.dimension_semantics<arbitrary>], iteration_bounds = array<i64: 2, 1>, scalar_prefetch = 0 : i64, scratch_operands = 3 : i64, tpu.core_type = #tpu.core_type<tc>, window_params = [{transform_indices = @transform_0, window_bounds = array<i64: 1, 8, 32>}, {transform_indices = @transform_1, window_bounds = array<i64: 1, 8, 32>}, {transform_indices = @transform_2, window_bounds = array<i64: 1, 1, 8>}, {pipeline_mode = #tpu.pipeline_mode<synchronous>, transform_indices = @transform_3, window_bounds = array<i64: 32, 64>}, {pipeline_mode = #tpu.pipeline_mode<synchronous>, transform_indices = @transform_4, window_bounds = array<i64: 32, 64>}, {pipeline_mode = #tpu.pipeline_mode<synchronous>, transform_indices = @transform_5, window_bounds = array<i64: 32, 64>}, {pipeline_mode = #tpu.pipeline_mode<synchronous>, transform_indices = @transform_6, window_bounds = array<i64: 64, 32>}, {pipeline_mode = #tpu.pipeline_mode<synchronous>, transform_indices = @transform_7, window_bounds = array<i64: 1, 32>}, {transform_indices = @transform_8, window_bounds = array<i64: 1, 8, 32>}]} {
    %c0_i32 = arith.constant 0 : i32
    %0 = arith.cmpi eq, %arg1, %c0_i32 : i32
    %1 = arith.extui %0 : i1 to i32
    %c0_i32_0 = arith.constant 0 : i32
    %2 = arith.cmpi ne, %1, %c0_i32_0 : i32
    scf.if %2 {
      %c0_43 = arith.constant 0 : index
      %c0_44 = arith.constant 0 : index
      %c0_45 = arith.constant 0 : index
      %101 = vector.load %arg3[%c0_43, %c0_44, %c0_45] : memref<1x8x32xbf16, #tpu.memory_space<vmem>>, vector<1x8x32xbf16>
      %102 = vector.shape_cast %101 : vector<1x8x32xbf16> to vector<8x32xbf16>
      %c0_46 = arith.constant 0 : index
      %c0_47 = arith.constant 0 : index
      %103 = vector.load %arg6[%c0_46, %c0_47] : memref<32x64xbf16, #tpu.memory_space<vmem>>, vector<32x64xbf16>
      %cst_48 = arith.constant dense<0.000000e+00> : vector<8x64xf32>
      %104 = tpu.matmul %102, %103, %cst_48 {dimension_numbers = #tpu.dot_dimension_numbers<[1], [0], [0], [1], [0, 0, 1, 1], [], []>} : vector<8x32xbf16>, vector<32x64xbf16>, vector<8x64xf32> -> vector<8x64xf32>
      %105 = arith.truncf %104 : vector<8x64xf32> to vector<8x64xbf16>
      %c0_49 = arith.constant 0 : index
      %c0_50 = arith.constant 0 : index
      %106 = vector.load %arg11[%c0_49, %c0_50] : memref<8x64xbf16, #tpu.memory_space<vmem>>, vector<8x64xbf16>
      tpu.vector_store %arg11[%c0_49, %c0_50], %105 {strides = array<i32>} : memref<8x64xbf16, #tpu.memory_space<vmem>>, vector<8x64xbf16>,
      %c0_51 = arith.constant 0 : index
      %c0_52 = arith.constant 0 : index
      %107 = vector.load %arg7[%c0_51, %c0_52] : memref<32x64xbf16, #tpu.memory_space<vmem>>, vector<32x64xbf16>
      %cst_53 = arith.constant dense<0.000000e+00> : vector<8x64xf32>
      %108 = tpu.matmul %102, %107, %cst_53 {dimension_numbers = #tpu.dot_dimension_numbers<[1], [0], [0], [1], [0, 0, 1, 1], [], []>} : vector<8x32xbf16>, vector<32x64xbf16>, vector<8x64xf32> -> vector<8x64xf32>
      %109 = arith.truncf %108 : vector<8x64xf32> to vector<8x64xbf16>
      %c0_54 = arith.constant 0 : index
      %c0_55 = arith.constant 0 : index
      %110 = vector.load %arg12[%c0_54, %c0_55] : memref<8x64xbf16, #tpu.memory_space<vmem>>, vector<8x64xbf16>
      tpu.vector_store %arg12[%c0_54, %c0_55], %109 {strides = array<i32>} : memref<8x64xbf16, #tpu.memory_space<vmem>>, vector<8x64xbf16>,
    } else {
    }
    %c0 = arith.constant 0 : index
    %c0_1 = arith.constant 0 : index
    %c0_2 = arith.constant 0 : index
    %3 = vector.load %arg2[%c0, %c0_1, %c0_2] : memref<1x8x32xbf16, #tpu.memory_space<vmem>>, vector<1x8x32xbf16>
    %4 = vector.shape_cast %3 : vector<1x8x32xbf16> to vector<8x32xbf16>
    %c0_3 = arith.constant 0 : index
    %c0_4 = arith.constant 0 : index
    %5 = vector.load %arg5[%c0_3, %c0_4] : memref<32x64xbf16, #tpu.memory_space<vmem>>, vector<32x64xbf16>
    %cst = arith.constant dense<0.000000e+00> : vector<8x64xf32>
    %6 = tpu.matmul %4, %5, %cst {dimension_numbers = #tpu.dot_dimension_numbers<[1], [0], [0], [1], [0, 0, 1, 1], [], []>} : vector<8x32xbf16>, vector<32x64xbf16>, vector<8x64xf32> -> vector<8x64xf32>
    %7 = arith.truncf %6 : vector<8x64xf32> to vector<8x64xbf16>
    %c0_5 = arith.constant 0 : index
    %c0_6 = arith.constant 0 : index
    %8 = vector.load %arg11[%c0_5, %c0_6] : memref<8x64xbf16, #tpu.memory_space<vmem>>, vector<8x64xbf16>
    %c0_7 = arith.constant 0 : index
    %c0_8 = arith.constant 0 : index
    %9 = vector.load %arg12[%c0_7, %c0_8] : memref<8x64xbf16, #tpu.memory_space<vmem>>, vector<8x64xbf16>
    %c0_9 = arith.constant 0 : index
    %c0_10 = arith.constant 0 : index
    %c0_11 = arith.constant 0 : index
    %10 = vector.load %arg4[%c0_9, %c0_10, %c0_11] : memref<1x1x8xf32, #tpu.memory_space<vmem>>, vector<1x1x8xf32>
    %11 = vector.shape_cast %10 : vector<1x1x8xf32> to vector<1x8xf32>
    %12 = vector.extract_strided_slice %7 {offsets = [0, 0], sizes = [8, 16], strides = [1, 1]} : vector<8x64xbf16> to vector<8x16xbf16>
    %13 = vector.extract_strided_slice %8 {offsets = [0, 0], sizes = [8, 16], strides = [1, 1]} : vector<8x64xbf16> to vector<8x16xbf16>
    %14 = vector.extract_strided_slice %9 {offsets = [0, 0], sizes = [8, 16], strides = [1, 1]} : vector<8x64xbf16> to vector<8x16xbf16>
    %cst_12 = arith.constant dense<0.000000e+00> : vector<8x8xf32>
    %15 = tpu.matmul %12, %13, %cst_12 {dimension_numbers = #tpu.dot_dimension_numbers<[1], [1], [0], [0], [0, 0, 1, 0], [], []>} : vector<8x16xbf16>, vector<8x16xbf16>, vector<8x8xf32> -> vector<8x8xf32>
    %16 = vector.broadcast %11 : vector<1x8xf32> to vector<8x8xf32>
    %17 = arith.addf %15, %16 : vector<8x8xf32>
    %cst_13 = arith.constant dense<0xFF800000> : vector<8xf32>
    %18 = vector.multi_reduction <maximumf>, %17, %cst_13 [1] : vector<8x8xf32> to vector<8xf32>
    %19 = vector.shape_cast %18 : vector<8xf32> to vector<8x1xf32>
    %20 = vector.broadcast %19 : vector<8x1xf32> to vector<8x8xf32>
    %21 = arith.subf %17, %20 : vector<8x8xf32>
    %22 = math.exp %21 : vector<8x8xf32>
    %cst_14 = arith.constant dense<0.000000e+00> : vector<8xf32>
    %23 = vector.multi_reduction <add>, %22, %cst_14 [1] : vector<8x8xf32> to vector<8xf32>
    %24 = vector.shape_cast %23 : vector<8xf32> to vector<8x1xf32>
    %25 = arith.truncf %22 : vector<8x8xf32> to vector<8x8xbf16>
    %cst_15 = arith.constant dense<0.000000e+00> : vector<8x16xf32>
    %26 = tpu.matmul %25, %14, %cst_15 {dimension_numbers = #tpu.dot_dimension_numbers<[1], [0], [0], [1], [0, 0, 1, 1], [], []>} : vector<8x8xbf16>, vector<8x16xbf16>, vector<8x16xf32> -> vector<8x16xf32>
    %27 = tpu.reciprocal %24 {approx = true} : vector<8x1xf32> -> vector<8x1xf32>
    %28 = vector.broadcast %27 : vector<8x1xf32> to vector<8x16xf32>
    %29 = arith.mulf %26, %28 : vector<8x16xf32>
    %30 = arith.truncf %29 : vector<8x16xf32> to vector<8x16xbf16>
    %c0_16 = arith.constant 0 : index
    %c0_17 = arith.constant 0 : index
    %31 = vector.load %arg13[%c0_16, %c0_17] : memref<8x64xbf16, #tpu.memory_space<vmem>>, vector<8x16xbf16>
    tpu.vector_store %arg13[%c0_16, %c0_17], %30 {strides = array<i32>} : memref<8x64xbf16, #tpu.memory_space<vmem>>, vector<8x16xbf16>,
    %32 = vector.extract_strided_slice %7 {offsets = [0, 16], sizes = [8, 16], strides = [1, 1]} : vector<8x64xbf16> to vector<8x16xbf16>
    %33 = vector.extract_strided_slice %8 {offsets = [0, 16], sizes = [8, 16], strides = [1, 1]} : vector<8x64xbf16> to vector<8x16xbf16>
    %34 = vector.extract_strided_slice %9 {offsets = [0, 16], sizes = [8, 16], strides = [1, 1]} : vector<8x64xbf16> to vector<8x16xbf16>
    %cst_18 = arith.constant dense<0.000000e+00> : vector<8x8xf32>
    %35 = tpu.matmul %32, %33, %cst_18 {dimension_numbers = #tpu.dot_dimension_numbers<[1], [1], [0], [0], [0, 0, 1, 0], [], []>} : vector<8x16xbf16>, vector<8x16xbf16>, vector<8x8xf32> -> vector<8x8xf32>
    %36 = vector.broadcast %11 : vector<1x8xf32> to vector<8x8xf32>
    %37 = arith.addf %35, %36 : vector<8x8xf32>
    %cst_19 = arith.constant dense<0xFF800000> : vector<8xf32>
    %38 = vector.multi_reduction <maximumf>, %37, %cst_19 [1] : vector<8x8xf32> to vector<8xf32>
    %39 = vector.shape_cast %38 : vector<8xf32> to vector<8x1xf32>
    %40 = vector.broadcast %39 : vector<8x1xf32> to vector<8x8xf32>
    %41 = arith.subf %37, %40 : vector<8x8xf32>
    %42 = math.exp %41 : vector<8x8xf32>
    %cst_20 = arith.constant dense<0.000000e+00> : vector<8xf32>
    %43 = vector.multi_reduction <add>, %42, %cst_20 [1] : vector<8x8xf32> to vector<8xf32>
    %44 = vector.shape_cast %43 : vector<8xf32> to vector<8x1xf32>
    %45 = arith.truncf %42 : vector<8x8xf32> to vector<8x8xbf16>
    %cst_21 = arith.constant dense<0.000000e+00> : vector<8x16xf32>
    %46 = tpu.matmul %45, %34, %cst_21 {dimension_numbers = #tpu.dot_dimension_numbers<[1], [0], [0], [1], [0, 0, 1, 1], [], []>} : vector<8x8xbf16>, vector<8x16xbf16>, vector<8x16xf32> -> vector<8x16xf32>
    %47 = tpu.reciprocal %44 {approx = true} : vector<8x1xf32> -> vector<8x1xf32>
    %48 = vector.broadcast %47 : vector<8x1xf32> to vector<8x16xf32>
    %49 = arith.mulf %46, %48 : vector<8x16xf32>
    %50 = arith.truncf %49 : vector<8x16xf32> to vector<8x16xbf16>
    %c0_22 = arith.constant 0 : index
    %c16 = arith.constant 16 : index
    %51 = vector.load %arg13[%c0_22, %c16] : memref<8x64xbf16, #tpu.memory_space<vmem>>, vector<8x16xbf16>
    tpu.vector_store %arg13[%c0_22, %c16], %50 {strides = array<i32>} : memref<8x64xbf16, #tpu.memory_space<vmem>>, vector<8x16xbf16>,
    %52 = vector.extract_strided_slice %7 {offsets = [0, 32], sizes = [8, 16], strides = [1, 1]} : vector<8x64xbf16> to vector<8x16xbf16>
    %53 = vector.extract_strided_slice %8 {offsets = [0, 32], sizes = [8, 16], strides = [1, 1]} : vector<8x64xbf16> to vector<8x16xbf16>
    %54 = vector.extract_strided_slice %9 {offsets = [0, 32], sizes = [8, 16], strides = [1, 1]} : vector<8x64xbf16> to vector<8x16xbf16>
    %cst_23 = arith.constant dense<0.000000e+00> : vector<8x8xf32>
    %55 = tpu.matmul %52, %53, %cst_23 {dimension_numbers = #tpu.dot_dimension_numbers<[1], [1], [0], [0], [0, 0, 1, 0], [], []>} : vector<8x16xbf16>, vector<8x16xbf16>, vector<8x8xf32> -> vector<8x8xf32>
    %56 = vector.broadcast %11 : vector<1x8xf32> to vector<8x8xf32>
    %57 = arith.addf %55, %56 : vector<8x8xf32>
    %cst_24 = arith.constant dense<0xFF800000> : vector<8xf32>
    %58 = vector.multi_reduction <maximumf>, %57, %cst_24 [1] : vector<8x8xf32> to vector<8xf32>
    %59 = vector.shape_cast %58 : vector<8xf32> to vector<8x1xf32>
    %60 = vector.broadcast %59 : vector<8x1xf32> to vector<8x8xf32>
    %61 = arith.subf %57, %60 : vector<8x8xf32>
    %62 = math.exp %61 : vector<8x8xf32>
    %cst_25 = arith.constant dense<0.000000e+00> : vector<8xf32>
    %63 = vector.multi_reduction <add>, %62, %cst_25 [1] : vector<8x8xf32> to vector<8xf32>
    %64 = vector.shape_cast %63 : vector<8xf32> to vector<8x1xf32>
    %65 = arith.truncf %62 : vector<8x8xf32> to vector<8x8xbf16>
    %cst_26 = arith.constant dense<0.000000e+00> : vector<8x16xf32>
    %66 = tpu.matmul %65, %54, %cst_26 {dimension_numbers = #tpu.dot_dimension_numbers<[1], [0], [0], [1], [0, 0, 1, 1], [], []>} : vector<8x8xbf16>, vector<8x16xbf16>, vector<8x16xf32> -> vector<8x16xf32>
    %67 = tpu.reciprocal %64 {approx = true} : vector<8x1xf32> -> vector<8x1xf32>
    %68 = vector.broadcast %67 : vector<8x1xf32> to vector<8x16xf32>
    %69 = arith.mulf %66, %68 : vector<8x16xf32>
    %70 = arith.truncf %69 : vector<8x16xf32> to vector<8x16xbf16>
    %c0_27 = arith.constant 0 : index
    %c32 = arith.constant 32 : index
    %71 = vector.load %arg13[%c0_27, %c32] : memref<8x64xbf16, #tpu.memory_space<vmem>>, vector<8x16xbf16>
    tpu.vector_store %arg13[%c0_27, %c32], %70 {strides = array<i32>} : memref<8x64xbf16, #tpu.memory_space<vmem>>, vector<8x16xbf16>,
    %72 = vector.extract_strided_slice %7 {offsets = [0, 48], sizes = [8, 16], strides = [1, 1]} : vector<8x64xbf16> to vector<8x16xbf16>
    %73 = vector.extract_strided_slice %8 {offsets = [0, 48], sizes = [8, 16], strides = [1, 1]} : vector<8x64xbf16> to vector<8x16xbf16>
    %74 = vector.extract_strided_slice %9 {offsets = [0, 48], sizes = [8, 16], strides = [1, 1]} : vector<8x64xbf16> to vector<8x16xbf16>
    %cst_28 = arith.constant dense<0.000000e+00> : vector<8x8xf32>
    %75 = tpu.matmul %72, %73, %cst_28 {dimension_numbers = #tpu.dot_dimension_numbers<[1], [1], [0], [0], [0, 0, 1, 0], [], []>} : vector<8x16xbf16>, vector<8x16xbf16>, vector<8x8xf32> -> vector<8x8xf32>
    %76 = vector.broadcast %11 : vector<1x8xf32> to vector<8x8xf32>
    %77 = arith.addf %75, %76 : vector<8x8xf32>
    %cst_29 = arith.constant dense<0xFF800000> : vector<8xf32>
    %78 = vector.multi_reduction <maximumf>, %77, %cst_29 [1] : vector<8x8xf32> to vector<8xf32>
    %79 = vector.shape_cast %78 : vector<8xf32> to vector<8x1xf32>
    %80 = vector.broadcast %79 : vector<8x1xf32> to vector<8x8xf32>
    %81 = arith.subf %77, %80 : vector<8x8xf32>
    %82 = math.exp %81 : vector<8x8xf32>
    %cst_30 = arith.constant dense<0.000000e+00> : vector<8xf32>
    %83 = vector.multi_reduction <add>, %82, %cst_30 [1] : vector<8x8xf32> to vector<8xf32>
    %84 = vector.shape_cast %83 : vector<8xf32> to vector<8x1xf32>
    %85 = arith.truncf %82 : vector<8x8xf32> to vector<8x8xbf16>
    %cst_31 = arith.constant dense<0.000000e+00> : vector<8x16xf32>
    %86 = tpu.matmul %85, %74, %cst_31 {dimension_numbers = #tpu.dot_dimension_numbers<[1], [0], [0], [1], [0, 0, 1, 1], [], []>} : vector<8x8xbf16>, vector<8x16xbf16>, vector<8x16xf32> -> vector<8x16xf32>
    %87 = tpu.reciprocal %84 {approx = true} : vector<8x1xf32> -> vector<8x1xf32>
    %88 = vector.broadcast %87 : vector<8x1xf32> to vector<8x16xf32>
    %89 = arith.mulf %86, %88 : vector<8x16xf32>
    %90 = arith.truncf %89 : vector<8x16xf32> to vector<8x16xbf16>
    %c0_32 = arith.constant 0 : index
    %c48 = arith.constant 48 : index
    %91 = vector.load %arg13[%c0_32, %c48] : memref<8x64xbf16, #tpu.memory_space<vmem>>, vector<8x16xbf16>
    tpu.vector_store %arg13[%c0_32, %c48], %90 {strides = array<i32>} : memref<8x64xbf16, #tpu.memory_space<vmem>>, vector<8x16xbf16>,
    %c0_33 = arith.constant 0 : index
    %c0_34 = arith.constant 0 : index
    %92 = vector.load %arg13[%c0_33, %c0_34] : memref<8x64xbf16, #tpu.memory_space<vmem>>, vector<8x64xbf16>
    %c0_35 = arith.constant 0 : index
    %c0_36 = arith.constant 0 : index
    %93 = vector.load %arg8[%c0_35, %c0_36] : memref<64x32xbf16, #tpu.memory_space<vmem>>, vector<64x32xbf16>
    %cst_37 = arith.constant dense<0.000000e+00> : vector<8x32xf32>
    %94 = tpu.matmul %92, %93, %cst_37 {dimension_numbers = #tpu.dot_dimension_numbers<[1], [0], [0], [1], [0, 0, 1, 1], [], []>} : vector<8x64xbf16>, vector<64x32xbf16>, vector<8x32xf32> -> vector<8x32xf32>
    %c0_38 = arith.constant 0 : index
    %c0_39 = arith.constant 0 : index
    %95 = vector.load %arg9[%c0_38, %c0_39] : memref<1x32xf32, #tpu.memory_space<vmem>>, vector<1x32xf32>
    %96 = vector.broadcast %95 : vector<1x32xf32> to vector<8x32xf32>
    %97 = arith.addf %94, %96 : vector<8x32xf32>
    %c0_40 = arith.constant 0 : index
    %c0_41 = arith.constant 0 : index
    %c0_42 = arith.constant 0 : index
    %98 = vector.load %arg10[%c0_40, %c0_41, %c0_42] : memref<1x8x32xf32, #tpu.memory_space<vmem>>, vector<1x8x32xf32>
    %99 = vector.shape_cast %98 : vector<1x8x32xf32> to vector<8x32xf32>
    %100 = vector.shape_cast %97 : vector<8x32xf32> to vector<1x8x32xf32>
    tpu.vector_store %arg10[%c0_40, %c0_41, %c0_42], %100 {strides = array<i32>} : memref<1x8x32xf32, #tpu.memory_space<vmem>>, vector<1x8x32xf32>,
    return
  }
  func.func @transform_0(%arg0: i32, %arg1: i32) -> (i32, i32, i32) {
    %c0_i32 = arith.constant 0 : i32
    %c0_i32_0 = arith.constant 0 : i32
    return %arg0, %arg1, %c0_i32 : i32, i32, i32
  }
  func.func @transform_1(%arg0: i32, %arg1: i32) -> (i32, i32, i32) {
    %c0_i32 = arith.constant 0 : i32
    %c0_i32_0 = arith.constant 0 : i32
    %c0_i32_1 = arith.constant 0 : i32
    return %arg0, %c0_i32, %c0_i32_0 : i32, i32, i32
  }
  func.func @transform_2(%arg0: i32, %arg1: i32) -> (i32, i32, i32) {
    %c0_i32 = arith.constant 0 : i32
    %c0_i32_0 = arith.constant 0 : i32
    %c0_i32_1 = arith.constant 0 : i32
    return %arg0, %c0_i32, %c0_i32_0 : i32, i32, i32
  }
  func.func @transform_3(%arg0: i32, %arg1: i32) -> (i32, i32) {
    %c0_i32 = arith.constant 0 : i32
    %c0_i32_0 = arith.constant 0 : i32
    %c0_i32_1 = arith.constant 0 : i32
    return %c0_i32, %c0_i32_0 : i32, i32
  }
  func.func @transform_4(%arg0: i32, %arg1: i32) -> (i32, i32) {
    %c0_i32 = arith.constant 0 : i32
    %c0_i32_0 = arith.constant 0 : i32
    %c0_i32_1 = arith.constant 0 : i32
    return %c0_i32, %c0_i32_0 : i32, i32
  }
  func.func @transform_5(%arg0: i32, %arg1: i32) -> (i32, i32) {
    %c0_i32 = arith.constant 0 : i32
    %c0_i32_0 = arith.constant 0 : i32
    %c0_i32_1 = arith.constant 0 : i32
    return %c0_i32, %c0_i32_0 : i32, i32
  }
  func.func @transform_6(%arg0: i32, %arg1: i32) -> (i32, i32) {
    %c0_i32 = arith.constant 0 : i32
    %c0_i32_0 = arith.constant 0 : i32
    %c0_i32_1 = arith.constant 0 : i32
    return %c0_i32, %c0_i32_0 : i32, i32
  }
  func.func @transform_7(%arg0: i32, %arg1: i32) -> (i32, i32) {
    %c0_i32 = arith.constant 0 : i32
    %c0_i32_0 = arith.constant 0 : i32
    %c0_i32_1 = arith.constant 0 : i32
    return %c0_i32, %c0_i32_0 : i32, i32
  }
  func.func @transform_8(%arg0: i32, %arg1: i32) -> (i32, i32, i32) {
    %c0_i32 = arith.constant 0 : i32
    %c0_i32_0 = arith.constant 0 : i32
    return %arg0, %arg1, %c0_i32 : i32, i32, i32
  }
}

</mosaic_0001>

<llo_original>
// kernel: tpu_custom_call.1
$region0: #{tpu_custom_call.1}
  #allocation0 [shape = 'u32[]', space=smem, size = 0x4, offset = 0x4, fixed_abs, tag = 'smem constant byte address 0x4 - core index']
  #allocation1 [shape = 'u32[72,128]{1,0:T(1,128)}', space=vmem, size = 0x9000, scoped, tag = 'internal scratch']
  #allocation2 [shape = 'bf16[8,64]{1,0:T(8,128)(2,1)}', space=vmem, size = 0x800, scoped, tag = 'scratch operand']
  #allocation3 [shape = 'bf16[8,64]{1,0:T(8,128)(2,1)}', space=vmem, size = 0x800, scoped, tag = 'scratch operand']
  #allocation4 [shape = 'bf16[8,64]{1,0:T(8,128)(2,1)}', space=vmem, size = 0x800, scoped, tag = 'scratch operand']
  %s0 = inlined_call_operand.hbm [shape: bf16[2,8,32], index: 0, kind: input, shape index: {}]
  %s1 = inlined_call_operand.hbm [shape: bf16[2,8,32], index: 1, kind: input, shape index: {}]
  %s2 = inlined_call_operand.hbm [shape: f32[2,1,8], index: 2, kind: input, shape index: {}]
  %s3 = inlined_call_operand.vmem [shape: bf16[32,64], index: 3, kind: input, shape index: {}]
  %s4 = inlined_call_operand.vmem [shape: bf16[32,64], index: 4, kind: input, shape index: {}]
  %s5 = inlined_call_operand.vmem [shape: bf16[32,64], index: 5, kind: input, shape index: {}]
  %s6 = inlined_call_operand.vmem [shape: bf16[64,32], index: 6, kind: input, shape index: {}]
  %s7 = inlined_call_operand.vmem [shape: f32[1,32], index: 7, kind: input, shape index: {}]
  %s8 = inlined_call_operand.hbm [shape: f32[2,8,32], index: 8, kind: output, shape index: {}]
  %s9 = sld [smem:[#allocation0]]
  $region81: #{tpu_custom_call.1} parent=0
    _
  %s11 = ssub.s32 1, %s9
  %s12 = scalar_select 0, %s11, %s9
  $region1: #{tpu_custom_call.1} parent=0
    #allocation5 [shape = 'u8[4096]{0}', space=vmem, size = 0x1000, scoped, tag = 'input window, operand 0']
    #allocation6 [shape = 's32[2]{0}', space=sflag, size = 0x8, scoped, tag = 'scoped memory for tpu_custom_call.1']
    #allocation7 [shape = 's32[2]{0}', space=sflag, size = 0x8, scoped, tag = 'scoped memory for tpu_custom_call.1']
    #allocation8 [shape = 'u8[4096]{0}', space=vmem, size = 0x1000, scoped, tag = 'input window, operand 1']
    #allocation9 [shape = 's32[2]{0}', space=sflag, size = 0x8, scoped, tag = 'scoped memory for tpu_custom_call.1']
    #allocation10 [shape = 'u8[1024]{0}', space=vmem, size = 0x400, scoped, tag = 'input window, operand 2']
    #allocation11 [shape = 'u8[8192]{0}', space=vmem, size = 0x2000, scoped, tag = 'output window, operand 0']
    %13 = vsyncpa [#allocation6], 0
    %s14 = scalar_lea.sflag [#allocation6], 1
    %15 = vsyncpa %s14, 0
    %16 = vsyncpa [#allocation9], 0
    %s17 = scalar_lea.sflag [#allocation9], 1
    %18 = vsyncpa %s17, 0
    %19 = vsyncpa [#allocation7], 0
    %s20 = scalar_lea.sflag [#allocation7], 1
    %21 = vsyncpa %s20, 0
    loop: start=0, step=1, limit=4
    $region2: #{tpu_custom_call.1} parent=1 // loop_pre_header
      _
    $region3: #{tpu_custom_call.1} parent=1 // loop_header
      %s23 = sphi 0, %s27
      %p24 = scmp.ge.s32.totalorder %s23, 4
      %s30 = sphi 0, %s42
      %s31 = sphi 0, %s38
      %s32 = sphi 0, %s30
      %s33 = sphi 0, %s31
      %s34 = sphi 0, %s32
      %s35 = sphi 0, %s33
      %s47 = sphi 0, %s49
      %s50 = sphi 0, %s47
      %s51 = sphi 0, %s50
      %s67 = sphi 0, %s51
      %s73 = sphi 0, %s75
      %s76 = sphi 0, %s73
      %s77 = sphi 0, %s76
      %s93 = sphi 0, %s77
      %s99 = sphi 0, %s101
      %s102 = sphi 0, %s99
      %s103 = sphi 0, %s102
      %s119 = sphi 0, %s103
      %s123 = sphi 0, %s123
      %s125 = sphi 0, %s123
      %s126 = sphi 0, %s125
      %s140 = sphi 0, %s126
      %s144 = sphi 0, %s144
      %s146 = sphi 0, %s144
      %s147 = sphi 0, %s146
      %s161 = sphi 0, %s147
      %s165 = sphi 0, %s165
      %s167 = sphi 0, %s165
      %s168 = sphi 0, %s167
      %s182 = sphi 0, %s168
      %s186 = sphi 0, %s186
      %s188 = sphi 0, %s186
      %s189 = sphi 0, %s188
      %s203 = sphi 0, %s189
      %s207 = sphi 0, %s207
      %s209 = sphi 0, %s207
      %s210 = sphi 0, %s209
      %s224 = sphi 0, %s210
      %s232 = sphi 0, %s234
      %s235 = sphi 0, %s232
      %s236 = sphi 0, %s235
      %s252 = sphi 0, %s236
    $region4: #{tpu_custom_call.1} parent=1 // loop_header_branch
      %26 = sbr.rel (%p24) target = $region8
    $region5: #{tpu_custom_call.1} parent=1 // loop_body
      %s28 = ssub.s32 %s23, 1
      %s29 = ssub.s32 %s23, 2
      %s36 = sadd.s32 1, %s31
      %p37 = scmp.ge.s32.totalorder %s36, 1
      %s38 = scalar_select %p37, 0, %s36
      %s39 = sadd.s32 1, %s30
      %s40 = scalar_select %p37, %s39, %s30
      %p41 = scmp.ge.s32.totalorder %s40, 2
      %s42 = scalar_select %p41, 0, %s40
      %s43 = ssub.s32 %s30, %s42
      %s44 = ssub.s32 %s31, %s38
      %s45 = sor.u32 %s43, %s44
      %p46 = scmp.eq.s32.totalorder %s45, 0
      %s48 = sadd.s32 %s47, 1
      %s49 = scalar_select %p46, %s47, %s48
      %p52 = pneg %p46
      %p53 = scmp.eq.s32.totalorder %s23, 1
      %p54 = por %p52, %p53
      %p55 = scmp.ne.s32.totalorder %s47, %s50
      %p56 = scmp.eq.s32.totalorder %s23, 0
      %p57 = por %p55, %p56
      %p58 = scmp.ne.s32.totalorder %s47, %s50
      %p59 = scmp.eq.s32.totalorder %s28, 1
      %p60 = por %p58, %p59
      %p61 = scmp.ne.s32.totalorder %s50, %s51
      %p62 = scmp.eq.s32.totalorder %s28, 0
      %p63 = por %p61, %p62
      %p64 = scmp.ne.s32.totalorder %s50, %s51
      %p65 = scmp.eq.s32.totalorder %s29, 1
      %p66 = por %p64, %p65
      %p68 = scmp.ne.s32.totalorder %s51, %s67
      %p69 = scmp.eq.s32.totalorder %s29, 0
      %p70 = por %p68, %p69
      %s71 = ssub.s32 %s30, %s42
      %p72 = scmp.eq.s32.totalorder %s71, 0
      %s74 = sadd.s32 %s73, 1
      %s75 = scalar_select %p72, %s73, %s74
      %p78 = pneg %p72
      %p79 = scmp.eq.s32.totalorder %s23, 1
      %p80 = por %p78, %p79
      %p81 = scmp.ne.s32.totalorder %s73, %s76
      %p82 = scmp.eq.s32.totalorder %s23, 0
      %p83 = por %p81, %p82
      %p84 = scmp.ne.s32.totalorder %s73, %s76
      %p85 = scmp.eq.s32.totalorder %s28, 1
      %p86 = por %p84, %p85
      %p87 = scmp.ne.s32.totalorder %s76, %s77
      %p88 = scmp.eq.s32.totalorder %s28, 0
      %p89 = por %p87, %p88
      %p90 = scmp.ne.s32.totalorder %s76, %s77
      %p91 = scmp.eq.s32.totalorder %s29, 1
      %p92 = por %p90, %p91
      %p94 = scmp.ne.s32.totalorder %s77, %s93
      %p95 = scmp.eq.s32.totalorder %s29, 0
      %p96 = por %p94, %p95
      %s97 = ssub.s32 %s30, %s42
      %p98 = scmp.eq.s32.totalorder %s97, 0
      %s100 = sadd.s32 %s99, 1
      %s101 = scalar_select %p98, %s99, %s100
      %p104 = pneg %p98
      %p105 = scmp.eq.s32.totalorder %s23, 1
      %p106 = por %p104, %p105
      %p107 = scmp.ne.s32.totalorder %s99, %s102
      %p108 = scmp.eq.s32.totalorder %s23, 0
      %p109 = por %p107, %p108
      %p110 = scmp.ne.s32.totalorder %s99, %s102
      %p111 = scmp.eq.s32.totalorder %s28, 1
      %p112 = por %p110, %p111
      %p113 = scmp.ne.s32.totalorder %s102, %s103
      %p114 = scmp.eq.s32.totalorder %s28, 0
      %p115 = por %p113, %p114
      %p116 = scmp.ne.s32.totalorder %s102, %s103
      %p117 = scmp.eq.s32.totalorder %s29, 1
      %p118 = por %p116, %p117
      %p120 = scmp.ne.s32.totalorder %s103, %s119
      %p121 = scmp.eq.s32.totalorder %s29, 0
      %p122 = por %p120, %p121
      %s124 = sadd.s32 %s123, 1
      %p127 = scmp.eq.s32.totalorder %s23, 1
      %p128 = scmp.ne.s32.totalorder %s123, %s125
      %p129 = scmp.eq.s32.totalorder %s23, 0
      %p130 = por %p128, %p129
      %p131 = scmp.ne.s32.totalorder %s123, %s125
      %p132 = scmp.eq.s32.totalorder %s28, 1
      %p133 = por %p131, %p132
      %p134 = scmp.ne.s32.totalorder %s125, %s126
      %p135 = scmp.eq.s32.totalorder %s28, 0
      %p136 = por %p134, %p135
      %p137 = scmp.ne.s32.totalorder %s125, %s126
      %p138 = scmp.eq.s32.totalorder %s29, 1
      %p139 = por %p137, %p138
      %p141 = scmp.ne.s32.totalorder %s126, %s140
      %p142 = scmp.eq.s32.totalorder %s29, 0
      %p143 = por %p141, %p142
      %s145 = sadd.s32 %s144, 1
      %p148 = scmp.eq.s32.totalorder %s23, 1
      %p149 = scmp.ne.s32.totalorder %s144, %s146
      %p150 = scmp.eq.s32.totalorder %s23, 0
      %p151 = por %p149, %p150
      %p152 = scmp.ne.s32.totalorder %s144, %s146
      %p153 = scmp.eq.s32.totalorder %s28, 1
      %p154 = por %p152, %p153
      %p155 = scmp.ne.s32.totalorder %s146, %s147
      %p156 = scmp.eq.s32.totalorder %s28, 0
      %p157 = por %p155, %p156
      %p158 = scmp.ne.s32.totalorder %s146, %s147
      %p159 = scmp.eq.s32.totalorder %s29, 1
      %p160 = por %p158, %p159
      %p162 = scmp.ne.s32.totalorder %s147, %s161
      %p163 = scmp.eq.s32.totalorder %s29, 0
      %p164 = por %p162, %p163
      %s166 = sadd.s32 %s165, 1
      %p169 = scmp.eq.s32.totalorder %s23, 1
      %p170 = scmp.ne.s32.totalorder %s165, %s167
      %p171 = scmp.eq.s32.totalorder %s23, 0
      %p172 = por %p170, %p171
      %p173 = scmp.ne.s32.totalorder %s165, %s167
      %p174 = scmp.eq.s32.totalorder %s28, 1
      %p175 = por %p173, %p174
      %p176 = scmp.ne.s32.totalorder %s167, %s168
      %p177 = scmp.eq.s32.totalorder %s28, 0
      %p178 = por %p176, %p177
      %p179 = scmp.ne.s32.totalorder %s167, %s168
      %p180 = scmp.eq.s32.totalorder %s29, 1
      %p181 = por %p179, %p180
      %p183 = scmp.ne.s32.totalorder %s168, %s182
      %p184 = scmp.eq.s32.totalorder %s29, 0
      %p185 = por %p183, %p184
      %s187 = sadd.s32 %s186, 1
      %p190 = scmp.eq.s32.totalorder %s23, 1
      %p191 = scmp.ne.s32.totalorder %s186, %s188
      %p192 = scmp.eq.s32.totalorder %s23, 0
      %p193 = por %p191, %p192
      %p194 = scmp.ne.s32.totalorder %s186, %s188
      %p195 = scmp.eq.s32.totalorder %s28, 1
      %p196 = por %p194, %p195
      %p197 = scmp.ne.s32.totalorder %s188, %s189
      %p198 = scmp.eq.s32.totalorder %s28, 0
      %p199 = por %p197, %p198
      %p200 = scmp.ne.s32.totalorder %s188, %s189
      %p201 = scmp.eq.s32.totalorder %s29, 1
      %p202 = por %p200, %p201
      %p204 = scmp.ne.s32.totalorder %s189, %s203
      %p205 = scmp.eq.s32.totalorder %s29, 0
      %p206 = por %p204, %p205
      %s208 = sadd.s32 %s207, 1
      %p211 = scmp.eq.s32.totalorder %s23, 1
      %p212 = scmp.ne.s32.totalorder %s207, %s209
      %p213 = scmp.eq.s32.totalorder %s23, 0
      %p214 = por %p212, %p213
      %p215 = scmp.ne.s32.totalorder %s207, %s209
      %p216 = scmp.eq.s32.totalorder %s28, 1
      %p217 = por %p215, %p216
      %p218 = scmp.ne.s32.totalorder %s209, %s210
      %p219 = scmp.eq.s32.totalorder %s28, 0
      %p220 = por %p218, %p219
      %p221 = scmp.ne.s32.totalorder %s209, %s210
      %p222 = scmp.eq.s32.totalorder %s29, 1
      %p223 = por %p221, %p222
      %p225 = scmp.ne.s32.totalorder %s210, %s224
      %p226 = scmp.eq.s32.totalorder %s29, 0
      %p227 = por %p225, %p226
      %s228 = ssub.s32 %s30, %s42
      %s229 = ssub.s32 %s31, %s38
      %s230 = sor.u32 %s228, %s229
      %p231 = scmp.eq.s32.totalorder %s230, 0
      %s233 = sadd.s32 %s232, 1
      %s234 = scalar_select %p231, %s232, %s233
      %p237 = pneg %p231
      %p238 = scmp.eq.s32.totalorder %s23, 1
      %p239 = por %p237, %p238
      %p240 = scmp.ne.s32.totalorder %s232, %s235
      %p241 = scmp.eq.s32.totalorder %s23, 0
      %p242 = por %p240, %p241
      %p243 = scmp.ne.s32.totalorder %s232, %s235
      %p244 = scmp.eq.s32.totalorder %s28, 1
      %p245 = por %p243, %p244
      %p246 = scmp.ne.s32.totalorder %s235, %s236
      %p247 = scmp.eq.s32.totalorder %s28, 0
      %p248 = por %p246, %p247
      %p249 = scmp.ne.s32.totalorder %s235, %s236
      %p250 = scmp.eq.s32.totalorder %s29, 1
      %p251 = por %p249, %p250
      %p253 = scmp.ne.s32.totalorder %s236, %s252
      %p254 = scmp.eq.s32.totalorder %s29, 0
      %p255 = por %p253, %p254
      %p256 = scmp.le.s32.totalorder 1, %s23
      %p257 = scmp.lt.s32.totalorder %s23, 3
      %p258 = pnand %p256, %p257
      %p259 = pneg %p258
      // Predicated region
      $region9: #{tpu_custom_call.1} parent=5 // pred_check
        _
      $region10: #{tpu_custom_call.1} parent=5 // pred_check_branch
        %261 = sbr.rel (%p258) target = $region12
      $region11: #{tpu_custom_call.1} parent=5 // pred_region
        %s262 = ssub.s32 %s23, 1
        // Predicated region
        $region13: #{tpu_custom_call.1} parent=11 // pred_check
          %p263 = pneg %p136
        $region14: #{tpu_custom_call.1} parent=11 // pred_check_branch
          %265 = sbr.rel (%p263) target = $region16
        $region15: #{tpu_custom_call.1} parent=11 // pred_region
          _
        $region16: #{tpu_custom_call.1} parent=11 // pred_fallthru
          _
        // Predicated region
        $region17: #{tpu_custom_call.1} parent=11 // pred_check
          %p266 = pneg %p157
        $region18: #{tpu_custom_call.1} parent=11 // pred_check_branch
          %268 = sbr.rel (%p266) target = $region20
        $region19: #{tpu_custom_call.1} parent=11 // pred_region
          _
        $region20: #{tpu_custom_call.1} parent=11 // pred_fallthru
          _
        // Predicated region
        $region21: #{tpu_custom_call.1} parent=11 // pred_check
          %p269 = pneg %p178
        $region22: #{tpu_custom_call.1} parent=11 // pred_check_branch
          %271 = sbr.rel (%p269) target = $region24
        $region23: #{tpu_custom_call.1} parent=11 // pred_region
          _
        $region24: #{tpu_custom_call.1} parent=11 // pred_fallthru
          _
        // Predicated region
        $region25: #{tpu_custom_call.1} parent=11 // pred_check
          %p272 = pneg %p199
        $region26: #{tpu_custom_call.1} parent=11 // pred_check_branch
          %274 = sbr.rel (%p272) target = $region28
        $region27: #{tpu_custom_call.1} parent=11 // pred_region
          _
        $region28: #{tpu_custom_call.1} parent=11 // pred_fallthru
          _
        // Predicated region
        $region29: #{tpu_custom_call.1} parent=11 // pred_check
          %p275 = pneg %p220
        $region30: #{tpu_custom_call.1} parent=11 // pred_check_branch
          %277 = sbr.rel (%p275) target = $region32
        $region31: #{tpu_custom_call.1} parent=11 // pred_region
          _
        $region32: #{tpu_custom_call.1} parent=11 // pred_fallthru
          _
      $region12: #{tpu_custom_call.1} parent=5 // pred_fallthru
        _
      %p278 = scmp.lt.s32.totalorder %s23, 2
      // Predicated region
      $region33: #{tpu_custom_call.1} parent=5 // pred_check
        %p279 = pneg %p278
      $region34: #{tpu_custom_call.1} parent=5 // pred_check_branch
        %281 = sbr.rel (%p279) target = $region36
      $region35: #{tpu_custom_call.1} parent=5 // pred_region
        // Predicated region
        $region37: #{tpu_custom_call.1} parent=35 // pred_check
          %p282 = pneg %p57
        $region38: #{tpu_custom_call.1} parent=35 // pred_check_branch
          %284 = sbr.rel (%p282) target = $region40
        $region39: #{tpu_custom_call.1} parent=35 // pred_region
          %s285 = sand.u32 %s47, 1
          %s286 = scalar_lea.sflag [#allocation6], %s285
          %s287 = sand.u32 %s47, 1
          %s288 = smul.addr %s287, 4
          %s289 = scalar_lea.vmem [#allocation5], %s288
          %291 = vsyncadd %s286, 0
          %s292 = sadd.s32 %s31, %s30
          %s293 = smul.addr %s292, 4
          %s294 = scalar_lea.hbm %s0, %s293
          %s296 = sshll.u32 %s294, 4
          %s297 = int_to_ptr.hbm [resolvable:$true] %s296
          %s298 = sshll.u32 %s289, 4
          %s299 = int_to_ptr.vmem [resolvable:$true] %s298
          %301 = dma.hbm_to_vmem [thread:$0]  %s297, 64, %s299, %s286
        $region40: #{tpu_custom_call.1} parent=35 // pred_fallthru
          _
        // Predicated region
        $region41: #{tpu_custom_call.1} parent=35 // pred_check
          %p302 = pneg %p83
        $region42: #{tpu_custom_call.1} parent=35 // pred_check_branch
          %304 = sbr.rel (%p302) target = $region44
        $region43: #{tpu_custom_call.1} parent=35 // pred_region
          %s305 = sand.u32 %s23, 1
          %s306 = scalar_lea.sflag [#allocation9], %s305
          %s307 = sand.u32 %s73, 1
          %s308 = smul.addr %s307, 4
          %s309 = scalar_lea.vmem [#allocation8], %s308
          %311 = vsyncadd %s306, 0
          %s312 = smul.addr %s30, 4
          %s313 = scalar_lea.hbm %s1, %s312
          %s315 = sshll.u32 %s313, 4
          %s316 = int_to_ptr.hbm [resolvable:$true] %s315
          %s317 = sshll.u32 %s309, 4
          %s318 = int_to_ptr.vmem [resolvable:$true] %s317
          %320 = dma.hbm_to_vmem [thread:$0]  %s316, 64, %s318, %s306
        $region44: #{tpu_custom_call.1} parent=35 // pred_fallthru
          _
        // Predicated region
        $region45: #{tpu_custom_call.1} parent=35 // pred_check
          %p321 = pneg %p109
        $region46: #{tpu_custom_call.1} parent=35 // pred_check_branch
          %323 = sbr.rel (%p321) target = $region48
        $region47: #{tpu_custom_call.1} parent=35 // pred_region
          %s324 = sand.u32 %s23, 1
          %s325 = scalar_lea.sflag [#allocation9], %s324
          %s326 = sand.u32 %s99, 1
          %s327 = scalar_lea.vmem [#allocation10], %s326
          %329 = vsyncadd %s325, 0
          %s330 = scalar_lea.hbm %s2, %s30
          %s332 = sshll.u32 %s330, 4
          %s333 = int_to_ptr.hbm [resolvable:$true] %s332
          %s334 = sshll.u32 %s327, 4
          %s335 = int_to_ptr.vmem [resolvable:$true] %s334
          %337 = dma.hbm_to_vmem [thread:$0]  %s333, 16, %s335, %s325
        $region48: #{tpu_custom_call.1} parent=35 // pred_fallthru
          _
      $region36: #{tpu_custom_call.1} parent=5 // pred_fallthru
        _
      %p338 = scmp.le.s32.totalorder 1, %s23
      %p339 = scmp.lt.s32.totalorder %s23, 3
      %p340 = pnand %p338, %p339
      %p341 = pneg %p340
      // Predicated region
      $region49: #{tpu_custom_call.1} parent=5 // pred_check
        _
      $region50: #{tpu_custom_call.1} parent=5 // pred_check_branch
        %343 = sbr.rel (%p340) target = $region52
      $region51: #{tpu_custom_call.1} parent=5 // pred_region
        %s344 = ssub.s32 %s23, 1
        %s345 = sand.u32 %s50, 1
        %s346 = scalar_lea.sflag [#allocation6], %s345
        %s347 = sand.u32 %s50, 1
        %s348 = smul.addr %s347, 4
        %s349 = scalar_lea.vmem [#allocation5], %s348
        // Predicated region
        $region53: #{tpu_custom_call.1} parent=51 // pred_check
          %p350 = pneg %p63
        $region54: #{tpu_custom_call.1} parent=51 // pred_check_branch
          %352 = sbr.rel (%p350) target = $region56
        $region55: #{tpu_custom_call.1} parent=51 // pred_region
          %354 = dma.done %s346, 64
        $region56: #{tpu_custom_call.1} parent=51 // pred_fallthru
          _
        %s355 = sand.u32 %s28, 1
        %s356 = scalar_lea.sflag [#allocation9], %s355
        %s357 = sand.u32 %s76, 1
        %s358 = smul.addr %s357, 4
        %s359 = scalar_lea.vmem [#allocation8], %s358
        // Predicated region
        $region57: #{tpu_custom_call.1} parent=51 // pred_check
          %p360 = pneg %p89
        $region58: #{tpu_custom_call.1} parent=51 // pred_check_branch
          %362 = sbr.rel (%p360) target = $region60
        $region59: #{tpu_custom_call.1} parent=51 // pred_region
          %364 = dma.done %s356, 64
        $region60: #{tpu_custom_call.1} parent=51 // pred_fallthru
          _
        %s365 = sand.u32 %s28, 1
        %s366 = scalar_lea.sflag [#allocation9], %s365
        %s367 = sand.u32 %s102, 1
        %s368 = scalar_lea.vmem [#allocation10], %s367
        // Predicated region
        $region61: #{tpu_custom_call.1} parent=51 // pred_check
          %p369 = pneg %p115
        $region62: #{tpu_custom_call.1} parent=51 // pred_check_branch
          %371 = sbr.rel (%p369) target = $region64
        $region63: #{tpu_custom_call.1} parent=51 // pred_region
          %373 = dma.done %s366, 16
        $region64: #{tpu_custom_call.1} parent=51 // pred_fallthru
          _
        %s374 = sand.u32 %s50, 1
        %s375 = scalar_lea.sflag [#allocation6], %s374
        %s376 = sand.u32 %s50, 1
        %s377 = smul.addr %s376, 4
        %s378 = scalar_lea.vmem [#allocation5], %s377
        %p379 = pneg %p63
        %p380 = pneg %p60
        %s381 = sand.u32 %s28, 1
        %s382 = scalar_lea.sflag [#allocation9], %s381
        %s383 = sand.u32 %s76, 1
        %s384 = smul.addr %s383, 4
        %s385 = scalar_lea.vmem [#allocation8], %s384
        %p386 = pneg %p89
        %p387 = pneg %p86
        %s388 = sand.u32 %s28, 1
        %s389 = scalar_lea.sflag [#allocation9], %s388
        %s390 = sand.u32 %s102, 1
        %s391 = scalar_lea.vmem [#allocation10], %s390
        %p392 = pneg %p115
        %p393 = pneg %p112
        %p394 = pneg %p136
        %p395 = pneg %p133
        %p396 = pneg %p157
        %p397 = pneg %p154
        %p398 = pneg %p178
        %p399 = pneg %p175
        %p400 = pneg %p199
        %p401 = pneg %p196
        %p402 = pneg %p220
        %p403 = pneg %p217
        %p404 = pneg %p248
        %p405 = pneg %p245
        %s406 = sand.u32 %s235, 1
        %s407 = scalar_lea.sflag [#allocation7], %s406
        %s408 = sand.u32 %s235, 1
        %s409 = smul.addr %s408, 8
        %s410 = scalar_lea.vmem [#allocation11], %s409
        %p412 = scmp.eq.s32.totalorder %s33, 0
        // Predicated region
        $region65: #{tpu_custom_call.1} parent=51 // pred_check
          %p413 = pneg %p412
        $region66: #{tpu_custom_call.1} parent=51 // pred_check_branch
          %415 = sbr.rel (%p413) target = $region68
        $region67: #{tpu_custom_call.1} parent=51 // pred_region
          %v416 = vld [vmem:[%s359] sm:$0xf]
          %v417 = vld [vmem:[%s4] sm:$0xf]
          %v418 = vld [vmem:[%s4 + $0x4] sm:$0xf]
          %v419 = vld [vmem:[%s4 + $0x8] sm:$0xf]
          %v420 = vld [vmem:[%s4 + $0xc] sm:$0xf]
          %v425 = vunpack.c.l.b16 %v417
          %v426 = vunpack.c.l.b16 %v418
          %v427 = vunpack.c.l.b16 %v419
          %v428 = vunpack.c.l.b16 %v420
          %v429 = vpack.c.b16 %v426, %v425
          %v430 = vpack.c.b16 %v428, %v427
          %vm433 = vcmask 261120
          %v435 = vsel %vm433, %v416, 0
          %437 = vmatpush.bf16.msra.mxu0 0
          %438 = vmatpush.bf16.msra.mxu0 0
          %439 = vmatpush.bf16.msra.mxu0 0
          %440 = vmatpush.bf16.msra.mxu0 0
          %441 = vmatpush.bf16.msra.mxu0 0
          %442 = vmatpush.bf16.msra.mxu0 0
          %443 = vmatpush.bf16.msra.mxu0 %v430
          %444 = vmatpush.bf16.msra.mxu0 %v429
          %445 = vmatmul.bf16.gmra.mxu0 %v435
          %v446 = vpop.f32.mrf.mxu0
          %v447 = vadd.f32 0.0, %v446
          %v448 = vpop.f32.mrf.mxu0
          %449 = vdwg.mxu0
          %v450 = vpack.c.bf16 %v447, %v447
          %vm451 = vcmask 519168
          %452 = vst.msk [vmem:[#allocation2] sm:$0xf] %vm451, %v450
          %v453 = vld [vmem:[%s5] sm:$0xf]
          %v454 = vld [vmem:[%s5 + $0x4] sm:$0xf]
          %v455 = vld [vmem:[%s5 + $0x8] sm:$0xf]
          %v456 = vld [vmem:[%s5 + $0xc] sm:$0xf]
          %v461 = vunpack.c.l.b16 %v453
          %v462 = vunpack.c.l.b16 %v454
          %v463 = vunpack.c.l.b16 %v455
          %v464 = vunpack.c.l.b16 %v456
          %v465 = vpack.c.b16 %v462, %v461
          %v466 = vpack.c.b16 %v464, %v463
          %469 = vmatpush.bf16.msra.mxu0 0
          %470 = vmatpush.bf16.msra.mxu0 0
          %471 = vmatpush.bf16.msra.mxu0 0
          %472 = vmatpush.bf16.msra.mxu0 0
          %473 = vmatpush.bf16.msra.mxu0 0
          %474 = vmatpush.bf16.msra.mxu0 0
          %475 = vmatpush.bf16.msra.mxu0 %v466
          %476 = vmatpush.bf16.msra.mxu0 %v465
          %477 = vmatmul.bf16.gmra.mxu0 %v435
          %v478 = vpop.f32.mrf.mxu0
          %v479 = vadd.f32 0.0, %v478
          %v480 = vpop.f32.mrf.mxu0
          %481 = vdwg.mxu0
          %v482 = vpack.c.bf16 %v479, %v479
          %483 = vst.msk [vmem:[#allocation3] sm:$0xf] %vm451, %v482
        $region68: #{tpu_custom_call.1} parent=51 // pred_fallthru
          _
        %v484 = vld [vmem:[%s349] sm:$0xf]
        %v485 = vld [vmem:[%s3] sm:$0xf]
        %v486 = vld [vmem:[%s3 + $0x4] sm:$0xf]
        %v487 = vld [vmem:[%s3 + $0x8] sm:$0xf]
        %v488 = vld [vmem:[%s3 + $0xc] sm:$0xf]
        %v493 = vunpack.c.l.b16 %v485
        %v494 = vunpack.c.l.b16 %v486
        %v495 = vunpack.c.l.b16 %v487
        %v496 = vunpack.c.l.b16 %v488
        %v497 = vpack.c.b16 %v494, %v493
        %v498 = vpack.c.b16 %v496, %v495
        %vm501 = vcmask 261120
        %v503 = vsel %vm501, %v484, 0
        %505 = vmatpush.bf16.msra.mxu0 0
        %506 = vmatpush.bf16.msra.mxu0 0
        %507 = vmatpush.bf16.msra.mxu0 0
        %508 = vmatpush.bf16.msra.mxu0 0
        %509 = vmatpush.bf16.msra.mxu0 0
        %510 = vmatpush.bf16.msra.mxu0 0
        %511 = vmatpush.bf16.msra.mxu0 %v498
        %512 = vmatpush.bf16.msra.mxu0 %v497
        %513 = vmatmul.bf16.gmra.mxu0 %v503
        %v514 = vpop.f32.mrf.mxu0
        %v515 = vadd.f32 0.0, %v514
        %v516 = vpop.f32.mrf.mxu0
        %517 = vdwg.mxu0
        %v518 = vpack.c.bf16 %v515, %v515
        %v519 = vld [vmem:[#allocation2] sm:$0xf]
        %v520 = vld [vmem:[#allocation3] sm:$0xf]
        %v521 = vld [vmem:[%s368] sm:$0x1]
        %v523 = vperm.slane %v521, 0
        %vm525 = vcmask 130048
        %v527 = vsel %vm525, %v518, 0
        %v530 = vsel %vm525, %v519, 0
        %532 = vmatpush.bf16.xpose.msra.mxu0 0
        %533 = vmatpush.bf16.xpose.msra.mxu0 0
        %534 = vmatpush.bf16.xpose.msra.mxu0 0
        %535 = vmatpush.bf16.xpose.msra.mxu0 0
        %536 = vmatpush.bf16.xpose.msra.mxu0 0
        %537 = vmatpush.bf16.xpose.msra.mxu0 0
        %538 = vmatpush.bf16.xpose.msra.mxu0 0
        %539 = vmatpush.bf16.xpose.msra.mxu0 %v530
        %540 = vmatmul.bf16.gmra.mxu0 %v527
        %v541 = vpop.f32.mrf.mxu0
        %v542 = vadd.f32 %v523, %v541
        %v543 = vpop.f32.mrf.mxu0
        %544 = vdwg.mxu0
        %vm545 = vcmask 64512
        %v546 = vsel %vm545, %v542, -inf
        %547 = vmax.xlane.f32.xlu0 %v546
        %v548 = vpop.xlane.xlu0 %547
        %v549 = vsub.f32 %v542, %v548
        %v550 = vmul.f32 %v549, 1.442695
        %v551 = vpow.pop %v550
        %v552 = vsel %vm545, %v551, 0.0
        %553 = vadd.xlane.f32.xlu0 %v552
        %v554 = vpop.xlane.xlu0 %553
        %v555 = vpack.c.bf16 %v551, %v551
        %v557 = vsel %vm545, %v555, 0
        %vm559 = vcmask 1043456
        %v561 = vsel %vm559, %v520, 0
        %563 = vmatpush.bf16.msra.mxu0 0
        %564 = vmatpush.bf16.msra.mxu0 0
        %565 = vmatpush.bf16.msra.mxu0 0
        %566 = vmatpush.bf16.msra.mxu0 0
        %567 = vmatpush.bf16.msra.mxu0 0
        %568 = vmatpush.bf16.msra.mxu0 0
        %569 = vmatpush.bf16.msra.mxu0 0
        %570 = vmatpush.bf16.msra.mxu0 %v561
        %571 = vmatmul.bf16.gmra.mxu0 %v557
        %v572 = vpop.f32.mrf.mxu0
        %v573 = vadd.f32 0.0, %v572
        %v574 = vpop.f32.mrf.mxu0
        %575 = vdwg.mxu0
        %v576 = vrcp.pop %v554
        %v577 = vmul.f32 %v573, %v576
        %v578 = vpack.c.bf16 %v577, %v577
        %vm579 = vcmask 125952
        %580 = vst.msk [vmem:[#allocation4] sm:$0xf] %vm579, %v578
        %v582 = vunpack.c.l.b16 %v518
        %v583 = vpack.c.b16 %v582, %v582
        %584 = vrot.lane.b32.xlu0 %v583, 112
        %v585 = vpop.permute.xlu0 %584
        %v587 = vunpack.c.l.b16 %v519
        %v588 = vpack.c.b16 %v587, %v587
        %589 = vrot.lane.b32.xlu0 %v588, 112
        %v590 = vpop.permute.xlu0 %589
        %v592 = vsel %vm525, %v585, 0
        %v595 = vsel %vm525, %v590, 0
        %597 = vmatpush.bf16.xpose.msra.mxu0 0
        %598 = vmatpush.bf16.xpose.msra.mxu0 0
        %599 = vmatpush.bf16.xpose.msra.mxu0 0
        %600 = vmatpush.bf16.xpose.msra.mxu0 0
        %601 = vmatpush.bf16.xpose.msra.mxu0 0
        %602 = vmatpush.bf16.xpose.msra.mxu0 0
        %603 = vmatpush.bf16.xpose.msra.mxu0 0
        %604 = vmatpush.bf16.xpose.msra.mxu0 %v595
        %605 = vmatmul.bf16.gmra.mxu0 %v592
        %v606 = vpop.f32.mrf.mxu0
        %v607 = vadd.f32 %v523, %v606
        %v608 = vpop.f32.mrf.mxu0
        %609 = vdwg.mxu0
        %v610 = vsel %vm545, %v607, -inf
        %611 = vmax.xlane.f32.xlu0 %v610
        %v612 = vpop.xlane.xlu0 %611
        %v613 = vsub.f32 %v607, %v612
        %v614 = vmul.f32 %v613, 1.442695
        %v615 = vpow.pop %v614
        %v616 = vsel %vm545, %v615, 0.0
        %617 = vadd.xlane.f32.xlu0 %v616
        %v618 = vpop.xlane.xlu0 %617
        %v619 = vpack.c.bf16 %v615, %v615
        %v621 = vunpack.c.l.b16 %v520
        %v622 = vpack.c.b16 %v621, %v621
        %623 = vrot.lane.b32.xlu0 %v622, 112
        %v624 = vpop.permute.xlu0 %623
        %v626 = vsel %vm545, %v619, 0
        %v629 = vsel %vm559, %v624, 0
        %631 = vmatpush.bf16.msra.mxu0 0
        %632 = vmatpush.bf16.msra.mxu0 0
        %633 = vmatpush.bf16.msra.mxu0 0
        %634 = vmatpush.bf16.msra.mxu0 0
        %635 = vmatpush.bf16.msra.mxu0 0
        %636 = vmatpush.bf16.msra.mxu0 0
        %637 = vmatpush.bf16.msra.mxu0 0
        %638 = vmatpush.bf16.msra.mxu0 %v629
        %639 = vmatmul.bf16.gmra.mxu0 %v626
        %v640 = vpop.f32.mrf.mxu0
        %v641 = vadd.f32 0.0, %v640
        %v642 = vpop.f32.mrf.mxu0
        %643 = vdwg.mxu0
        %v644 = vrcp.pop %v618
        %v645 = vmul.f32 %v641, %v644
        %v646 = vpack.c.bf16 %v645, %v645
        %648 = vrot.lane.b32.xlu0 %v646, 16
        %v649 = vpop.permute.xlu0 %648
        %vm651 = vcmask 257152
        %652 = vst.msk [vmem:[#allocation4] sm:$0xf] %vm651, %v649
        %653 = vrot.lane.b32.xlu0 %v583, 96
        %v654 = vpop.permute.xlu0 %653
        %655 = vrot.lane.b32.xlu0 %v588, 96
        %v656 = vpop.permute.xlu0 %655
        %v658 = vsel %vm525, %v654, 0
        %v661 = vsel %vm525, %v656, 0
        %663 = vmatpush.bf16.xpose.msra.mxu0 0
        %664 = vmatpush.bf16.xpose.msra.mxu0 0
        %665 = vmatpush.bf16.xpose.msra.mxu0 0
        %666 = vmatpush.bf16.xpose.msra.mxu0 0
        %667 = vmatpush.bf16.xpose.msra.mxu0 0
        %668 = vmatpush.bf16.xpose.msra.mxu0 0
        %669 = vmatpush.bf16.xpose.msra.mxu0 0
        %670 = vmatpush.bf16.xpose.msra.mxu0 %v661
        %671 = vmatmul.bf16.gmra.mxu0 %v658
        %v672 = vpop.f32.mrf.mxu0
        %v673 = vadd.f32 %v523, %v672
        %v674 = vpop.f32.mrf.mxu0
        %675 = vdwg.mxu0
        %v676 = vsel %vm545, %v673, -inf
        %677 = vmax.xlane.f32.xlu0 %v676
        %v678 = vpop.xlane.xlu0 %677
        %v679 = vsub.f32 %v673, %v678
        %v680 = vmul.f32 %v679, 1.442695
        %v681 = vpow.pop %v680
        %v682 = vsel %vm545, %v681, 0.0
        %683 = vadd.xlane.f32.xlu0 %v682
        %v684 = vpop.xlane.xlu0 %683
        %v685 = vpack.c.bf16 %v681, %v681
        %686 = vrot.lane.b32.xlu0 %v622, 96
        %v687 = vpop.permute.xlu0 %686
        %v689 = vsel %vm545, %v685, 0
        %v692 = vsel %vm559, %v687, 0
        %694 = vmatpush.bf16.msra.mxu0 0
        %695 = vmatpush.bf16.msra.mxu0 0
        %696 = vmatpush.bf16.msra.mxu0 0
        %697 = vmatpush.bf16.msra.mxu0 0
        %698 = vmatpush.bf16.msra.mxu0 0
        %699 = vmatpush.bf16.msra.mxu0 0
        %700 = vmatpush.bf16.msra.mxu0 0
        %701 = vmatpush.bf16.msra.mxu0 %v692
        %702 = vmatmul.bf16.gmra.mxu0 %v689
        %v703 = vpop.f32.mrf.mxu0
        %v704 = vadd.f32 0.0, %v703
        %v705 = vpop.f32.mrf.mxu0
        %706 = vdwg.mxu0
        %v707 = vrcp.pop %v684
        %v708 = vmul.f32 %v704, %v707
        %v709 = vpack.c.bf16 %v708, %v708
        %711 = vrot.lane.b32.xlu0 %v709, 32
        %v712 = vpop.permute.xlu0 %711
        %vm714 = vcmask 388352
        %715 = vst.msk [vmem:[#allocation4] sm:$0xf] %vm714, %v712
        %716 = vrot.lane.b32.xlu0 %v583, 80
        %v717 = vpop.permute.xlu0 %716
        %718 = vrot.lane.b32.xlu0 %v588, 80
        %v719 = vpop.permute.xlu0 %718
        %v721 = vsel %vm525, %v717, 0
        %v724 = vsel %vm525, %v719, 0
        %726 = vmatpush.bf16.xpose.msra.mxu0 0
        %727 = vmatpush.bf16.xpose.msra.mxu0 0
        %728 = vmatpush.bf16.xpose.msra.mxu0 0
        %729 = vmatpush.bf16.xpose.msra.mxu0 0
        %730 = vmatpush.bf16.xpose.msra.mxu0 0
        %731 = vmatpush.bf16.xpose.msra.mxu0 0
        %732 = vmatpush.bf16.xpose.msra.mxu0 0
        %733 = vmatpush.bf16.xpose.msra.mxu0 %v724
        %734 = vmatmul.bf16.gmra.mxu0 %v721
        %v735 = vpop.f32.mrf.mxu0
        %v736 = vadd.f32 %v523, %v735
        %v737 = vpop.f32.mrf.mxu0
        %738 = vdwg.mxu0
        %v739 = vsel %vm545, %v736, -inf
        %740 = vmax.xlane.f32.xlu0 %v739
        %v741 = vpop.xlane.xlu0 %740
        %v742 = vsub.f32 %v736, %v741
        %v743 = vmul.f32 %v742, 1.442695
        %v744 = vpow.pop %v743
        %v745 = vsel %vm545, %v744, 0.0
        %746 = vadd.xlane.f32.xlu0 %v745
        %v747 = vpop.xlane.xlu0 %746
        %v748 = vpack.c.bf16 %v744, %v744
        %749 = vrot.lane.b32.xlu0 %v622, 80
        %v750 = vpop.permute.xlu0 %749
        %v752 = vsel %vm545, %v748, 0
        %v755 = vsel %vm559, %v750, 0
        %757 = vmatpush.bf16.msra.mxu0 0
        %758 = vmatpush.bf16.msra.mxu0 0
        %759 = vmatpush.bf16.msra.mxu0 0
        %760 = vmatpush.bf16.msra.mxu0 0
        %761 = vmatpush.bf16.msra.mxu0 0
        %762 = vmatpush.bf16.msra.mxu0 0
        %763 = vmatpush.bf16.msra.mxu0 0
        %764 = vmatpush.bf16.msra.mxu0 %v755
        %765 = vmatmul.bf16.gmra.mxu0 %v752
        %v766 = vpop.f32.mrf.mxu0
        %v767 = vadd.f32 0.0, %v766
        %v768 = vpop.f32.mrf.mxu0
        %769 = vdwg.mxu0
        %v770 = vrcp.pop %v747
        %v771 = vmul.f32 %v767, %v770
        %v772 = vpack.c.bf16 %v771, %v771
        %774 = vrot.lane.b32.xlu0 %v772, 48
        %v775 = vpop.permute.xlu0 %774
        %vm777 = vcmask 519552
        %778 = vst.msk [vmem:[#allocation4] sm:$0xf] %vm777, %v775
        %v779 = vld [vmem:[#allocation4] sm:$0xf]
        %v780 = vld [vmem:[%s6] sm:$0xf]
        %v781 = vld [vmem:[%s6 + $0x4] sm:$0xf]
        %v782 = vld [vmem:[%s6 + $0x8] sm:$0xf]
        %v783 = vld [vmem:[%s6 + $0xc] sm:$0xf]
        %v784 = vld [vmem:[%s6 + $0x10] sm:$0xf]
        %v785 = vld [vmem:[%s6 + $0x14] sm:$0xf]
        %v786 = vld [vmem:[%s6 + $0x18] sm:$0xf]
        %v787 = vld [vmem:[%s6 + $0x1c] sm:$0xf]
        %v788 = vld [vmem:[%s7] sm:$0x1]
        %v790 = vperm.slane %v788, 0
        %v800 = vunpack.c.l.b16 %v780
        %v801 = vunpack.c.l.b16 %v781
        %v802 = vunpack.c.l.b16 %v782
        %v803 = vunpack.c.l.b16 %v783
        %v804 = vunpack.c.l.b16 %v784
        %v805 = vunpack.c.l.b16 %v785
        %v806 = vunpack.c.l.b16 %v786
        %v807 = vunpack.c.l.b16 %v787
        %v808 = vpack.c.b16 %v801, %v800
        %v809 = vpack.c.b16 %v803, %v802
        %v810 = vpack.c.b16 %v805, %v804
        %v811 = vpack.c.b16 %v807, %v806
        %vm816 = vcmask 523264
        %v818 = vsel %vm816, %v779, 0
        %820 = vmatpush.bf16.msra.mxu0 0
        %821 = vmatpush.bf16.msra.mxu0 0
        %822 = vmatpush.bf16.msra.mxu0 0
        %823 = vmatpush.bf16.msra.mxu0 0
        %824 = vmatpush.bf16.msra.mxu0 %v811
        %825 = vmatpush.bf16.msra.mxu0 %v810
        %826 = vmatpush.bf16.msra.mxu0 %v809
        %827 = vmatpush.bf16.msra.mxu0 %v808
        %828 = vmatmul.bf16.gmra.mxu0 %v818
        %v829 = vpop.f32.mrf.mxu0
        %v830 = vadd.f32 %v790, %v829
        %v831 = vpop.f32.mrf.mxu0
        %832 = vdwg.mxu0
        %833 = vst.msk [vmem:[%s410] sm:$0xff] %vm501, %v830
        %s834 = sand.u32 %s235, 1
        %s835 = scalar_lea.sflag [#allocation7], %s834
        %s836 = sand.u32 %s235, 1
        %s837 = smul.addr %s836, 8
        %s838 = scalar_lea.vmem [#allocation11], %s837
        // Predicated region
        $region69: #{tpu_custom_call.1} parent=51 // pred_check
          %p839 = pneg %p245
        $region70: #{tpu_custom_call.1} parent=51 // pred_check_branch
          %841 = sbr.rel (%p839) target = $region72
        $region71: #{tpu_custom_call.1} parent=51 // pred_region
          %843 = vsyncadd %s835, 0
          %s844 = sadd.s32 %s33, %s32
          %s845 = smul.addr %s844, 8
          %s846 = scalar_lea.hbm %s8, %s845
          %s848 = sshll.u32 %s838, 4
          %s849 = int_to_ptr.vmem [resolvable:$true] %s848
          %s850 = sshll.u32 %s846, 4
          %s851 = int_to_ptr.hbm [resolvable:$true] %s850
          %853 = dma.vmem_to_hbm [thread:$0]  %s849, 128, %s851, %s835
        $region72: #{tpu_custom_call.1} parent=51 // pred_fallthru
          _
      $region52: #{tpu_custom_call.1} parent=5 // pred_fallthru
        _
      %p854 = scmp.le.s32.totalorder 2, %s23
      // Predicated region
      $region73: #{tpu_custom_call.1} parent=5 // pred_check
        %p855 = pneg %p854
      $region74: #{tpu_custom_call.1} parent=5 // pred_check_branch
        %857 = sbr.rel (%p855) target = $region76
      $region75: #{tpu_custom_call.1} parent=5 // pred_region
        %s858 = ssub.s32 %s23, 2
        // Predicated region
        $region77: #{tpu_custom_call.1} parent=75 // pred_check
          %p859 = pneg %p251
        $region78: #{tpu_custom_call.1} parent=75 // pred_check_branch
          %861 = sbr.rel (%p859) target = $region80
        $region79: #{tpu_custom_call.1} parent=75 // pred_region
          %s862 = sand.u32 %s236, 1
          %s863 = scalar_lea.sflag [#allocation7], %s862
          %s864 = sand.u32 %s236, 1
          %s865 = smul.addr %s864, 8
          %s866 = scalar_lea.vmem [#allocation11], %s865
          %868 = dma.done %s863, 128
        $region80: #{tpu_custom_call.1} parent=75 // pred_fallthru
          _
      $region76: #{tpu_custom_call.1} parent=5 // pred_fallthru
        _
    $region6: #{tpu_custom_call.1} parent=1 // loop_footer
      %s27 = sadd.s32 1, %s23
    $region7: #{tpu_custom_call.1} parent=1 // loop_footer_branch
      %22 = sbr.rel target = $region3
    $region8: #{tpu_custom_call.1} parent=1 // loop_exit
      _
    %869 = vsyncpa [#allocation6], 1
    %s870 = scalar_lea.sflag [#allocation6], 1
    %871 = vsyncpa %s870, 1
    %872 = vsyncpa [#allocation9], 1
    %s873 = scalar_lea.sflag [#allocation9], 1
    %874 = vsyncpa %s873, 1
    %875 = vsyncpa [#allocation7], 1
    %s876 = scalar_lea.sflag [#allocation7], 1
    %877 = vsyncpa %s876, 1

</llo_original>
